<compile_context>
chip_gen: v7x
topology: tpu7x:2x2x1
jax: 0.10.0
libtpu: 0.0.40
codegen_flags: <defaults>
</compile_context>

<pallas_src>
from math import log as ln

import jax
import jax.numpy as jnp
from jax.experimental import pallas as pl
from jax.experimental.pallas import tpu as pltpu

_LANE = 128
_SUBLANE = 8


def _vmem_capacity_bytes():
    """Best-effort query of per-core VMEM capacity; None if unavailable."""
    try:
        info = pltpu.get_tpu_info()
        cap = getattr(info, "vmem_capacity_bytes", None)
        if cap:
            return int(cap)
    except Exception:
        pass
    return None


def _budgets():
    """(per-x-block byte budget, vmem_limit ceiling) for this generation."""
    cap = _vmem_capacity_bytes()
    if cap is None or cap <= 64 * 1024 * 1024:
        # v7x (64 MiB physical) or unknown -> stay conservative.
        return 6 * 1024 * 1024, 48 * 1024 * 1024
    # v5e / v6e: 128 MiB physical VMEM.
    return 8 * 1024 * 1024, 96 * 1024 * 1024


def _choose_tiles(R, T, itemsize, budget):
    """Pick (r_tile, t_tile) for an [R, T] stream under `budget` bytes/block."""
    # Prefer full-T tiles: each row of the block is then one contiguous HBM run.
    if T * itemsize * min(R, _SUBLANE) <= budget:
        t_tile = T
        r_max = budget // (T * itemsize)
        if r_max >= R:
            r_tile = R                                    # single row-block
        else:
            r_tile = max(_SUBLANE, (r_max // _SUBLANE) * _SUBLANE)
    else:
        r_tile = R if R < _SUBLANE else _SUBLANE
        t_max = budget // (max(r_tile, 1) * itemsize)
        t_tile = min(T, max(_LANE, (t_max // _LANE) * _LANE))
    return r_tile, t_tile


def _pe_add_kernel(enc_ref, x_ref, o_ref):
    # enc_ref: VMEM [r_tile, 1]      f32
    # x_ref:   VMEM [r_tile, t_tile] x.dtype
    # o_ref:   VMEM [r_tile, t_tile] x.dtype
    x = x_ref[...].astype(jnp.float32)
    o_ref[...] = (x + enc_ref[...]).astype(o_ref.dtype)   # broadcast over time


def positional_encoding(x, noise_level, *, r_tile=None, t_tile=None,
                        donate_x=False):
    """x: [N, C, T] (f32 or bf16), noise_level: [N] -> [N, C, T] (x.dtype)."""
    N, C, T = x.shape
    assert C % 2 == 0, "dim (C) must be even"
    half = C // 2

    # Tiny [N, C] encoding in f32 (matches the PyTorch f32 math exactly).
    step = jnp.arange(half, dtype=jnp.float32) / half
    arg = noise_level.astype(jnp.float32)[:, None] * \
        jnp.exp(-ln(10000.0) * step)[None, :]
    enc = jnp.concatenate([jnp.sin(arg), jnp.cos(arg)], axis=-1)   # [N, C] f32

    R = N * C
    x_flat = x.reshape(R, T)            # free (view) on a contiguous [N,C,T]
    enc_flat = enc.reshape(R, 1)

    itemsize = jnp.dtype(x.dtype).itemsize
    budget, vmem_ceiling = _budgets()
    auto_r, auto_t = _choose_tiles(R, T, itemsize, budget)

    if r_tile is None:
        r_tile = auto_r
    else:
        r_tile = min(int(r_tile), R)
        if r_tile < R:
            r_tile = max(_SUBLANE, (r_tile // _SUBLANE) * _SUBLANE)
    if t_tile is None:
        t_tile = auto_t
    else:
        t_tile = min(int(t_tile), T)
        if t_tile < T:
            t_tile = max(_LANE, (t_tile // _LANE) * _LANE)

    num_r = pl.cdiv(R, r_tile)
    num_t = pl.cdiv(T, t_tile)

    # VMEM budget derived from the actual blocks: double-buffered x in + out
    # (4 x block), double-buffered tiny enc block, plus slack for Mosaic.
    block_bytes = r_tile * t_tile * itemsize
    vmem_limit = 4 * block_bytes + 2 * r_tile * 4 + (4 << 20)
    vmem_limit = int(min(vmem_ceiling, max(16 << 20, vmem_limit)))

    # Put the larger grid axis first so v7x's megacore split of the "parallel"
    # dims is balanced across both TensorCores (no-op on v5e/v6e).
    if num_t >= num_r:
        grid = (num_t, num_r)
        x_map = lambda t, r: (r, t)
        enc_map = lambda t, r: (r, 0)
    else:
        grid = (num_r, num_t)
        x_map = lambda r, t: (r, t)
        enc_map = lambda r, t: (r, 0)

    out_flat = pl.pallas_call(
        _pe_add_kernel,
        out_shape=jax.ShapeDtypeStruct((R, T), x.dtype),
        grid=grid,
        in_specs=[
            pl.BlockSpec((r_tile, 1), enc_map),        # enc (tiny, per-row)
            pl.BlockSpec((r_tile, t_tile), x_map),     # x tile
        ],
        out_specs=pl.BlockSpec((r_tile, t_tile), x_map),
        compiler_params=pltpu.CompilerParams(
            dimension_semantics=(pltpu.PARALLEL, pltpu.PARALLEL),
            vmem_limit_bytes=vmem_limit,
        ),
        input_output_aliases=({1: 0} if donate_x else {}),
    )(enc_flat, x_flat)

    return out_flat.reshape(N, C, T)


if __name__ == "__main__":
    N, C, T = 2, 32, 512          # dim == C

    key = jax.random.PRNGKey(0)
    k_x, k_n = jax.random.split(key)
    x = jax.random.normal(k_x, (N, C, T), dtype=jnp.float32)
    noise_level = jax.random.uniform(k_n, (N,), dtype=jnp.float32)

    # pure-JAX reference mirroring the PyTorch module
    half = C // 2
    step = jnp.arange(half, dtype=jnp.float32) / half
    arg = noise_level[:, None] * jnp.exp(-ln(10000.0) * step)[None, :]
    enc = jnp.concatenate([jnp.sin(arg), jnp.cos(arg)], axis=-1)
    ref = x + enc[:, :, None]

    # 1) auto-sized tiles (single block at this small shape)
    out = jax.block_until_ready(positional_encoding(x, noise_level))
    assert out.shape == (N, C, T)
    assert jnp.allclose(out, ref, atol=1e-5, rtol=1e-5), \
        float(jnp.max(jnp.abs(out - ref)))

    # 2) forced small tiles to exercise the row x time grid (grid = (4, 4))
    out2 = jax.block_until_ready(
        positional_encoding(x, noise_level, r_tile=16, t_tile=128))
    assert jnp.allclose(out2, ref, atol=1e-5, rtol=1e-5), \
        float(jnp.max(jnp.abs(out2 - ref)))

    # 3) bf16 I/O path (add done in f32 in-kernel, cast on store)
    x_bf = x.astype(jnp.bfloat16)
    out_bf = jax.block_until_ready(positional_encoding(x_bf, noise_level))
    ref_bf = (x_bf.astype(jnp.float32) + enc[:, :, None]).astype(jnp.bfloat16)
    assert jnp.allclose(out_bf.astype(jnp.float32),
                        ref_bf.astype(jnp.float32), atol=1e-2, rtol=1e-2)

    print("KERNEL_OK")
</pallas_src>

<mosaic_0001>
module attributes {stable_mosaic.version = 11 : i64} {
  func.func @_pe_add_kernel(%arg0: i32, %arg1: i32, %arg2: memref<64x1xf32, #tpu.memory_space<vmem>>, %arg3: memref<64x512xf32, #tpu.memory_space<vmem>>, %arg4: memref<64x512xf32, #tpu.memory_space<vmem>>) attributes {dimension_semantics = [#tpu.dimension_semantics<parallel>, #tpu.dimension_semantics<parallel>], iteration_bounds = array<i64: 1, 1>, scalar_prefetch = 0 : i64, scratch_operands = 0 : i64, tpu.core_type = #tpu.core_type<tc>, window_params = [{transform_indices = @transform_0, window_bounds = array<i64: 64, 1>}, {transform_indices = @transform_1, window_bounds = array<i64: 64, 512>}, {transform_indices = @transform_2, window_bounds = array<i64: 64, 512>}]} {
    %c0 = arith.constant 0 : index
    %c0_0 = arith.constant 0 : index
    %0 = vector.load %arg3[%c0, %c0_0] : memref<64x512xf32, #tpu.memory_space<vmem>>, vector<64x512xf32>
    %c0_1 = arith.constant 0 : index
    %c0_2 = arith.constant 0 : index
    %1 = vector.load %arg2[%c0_1, %c0_2] : memref<64x1xf32, #tpu.memory_space<vmem>>, vector<64x1xf32>
    %2 = vector.broadcast %1 : vector<64x1xf32> to vector<64x512xf32>
    %3 = arith.addf %0, %2 : vector<64x512xf32>
    %c0_3 = arith.constant 0 : index
    %c0_4 = arith.constant 0 : index
    %4 = vector.load %arg4[%c0_3, %c0_4] : memref<64x512xf32, #tpu.memory_space<vmem>>, vector<64x512xf32>
    tpu.vector_store %arg4[%c0_3, %c0_4], %3 {strides = array<i32>} : memref<64x512xf32, #tpu.memory_space<vmem>>, vector<64x512xf32>,
    return
  }
  func.func @transform_0(%arg0: i32, %arg1: i32) -> (i32, i32) {
    %c0_i32 = arith.constant 0 : i32
    %c0_i32_0 = arith.constant 0 : i32
    return %arg1, %c0_i32 : i32, i32
  }
  func.func @transform_1(%arg0: i32, %arg1: i32) -> (i32, i32) {
    %c0_i32 = arith.constant 0 : i32
    return %arg1, %arg0 : i32, i32
  }
  func.func @transform_2(%arg0: i32, %arg1: i32) -> (i32, i32) {
    %c0_i32 = arith.constant 0 : i32
    return %arg1, %arg0 : i32, i32
  }
}

</mosaic_0001>

<llo_original>
// kernel: tpu_custom_call.1
$region0: #{tpu_custom_call.1}
  #allocation0 [shape = 'u32[]', space=smem, size = 0x4, offset = 0x4, fixed_abs, tag = 'smem constant byte address 0x4 - core index']
  #allocation1 [shape = 'u32[144,128]{1,0:T(1,128)}', space=vmem, size = 0x12000, scoped, tag = 'internal scratch']
  %s0 = inlined_call_operand.vmem [shape: f32[64,1], index: 0, kind: input, shape index: {}]
  %s1 = inlined_call_operand.hbm [shape: f32[64,512], index: 1, kind: input, shape index: {}]
  %s2 = inlined_call_operand.hbm [shape: f32[64,512], index: 2, kind: output, shape index: {}]
  %s3 = sld [smem:[#allocation0]]
  $region22: #{tpu_custom_call.1} parent=0
    _
  %s5 = ssub.s32 1, %s3
  %s6 = scalar_select 0, %s5, %s3
  $region1: #{tpu_custom_call.1} parent=0
    #allocation2 [shape = 'u8[131072]{0}', space=vmem, size = 0x20000, scoped, tag = 'input window, operand 1, single buffered']
    #allocation3 [shape = 's32[1]{0}', space=sflag, size = 0x4, scoped, tag = 'scoped memory for tpu_custom_call.1']
    #allocation4 [shape = 's32[1]{0}', space=sflag, size = 0x4, scoped, tag = 'scoped memory for tpu_custom_call.1']
    #allocation5 [shape = 'u8[131072]{0}', space=vmem, size = 0x20000, scoped, tag = 'output window, operand 0, single buffered']
    %7 = vsyncpa [#allocation3], 0
    %8 = vsyncpa [#allocation4], 0
    // Predicated region
    $region2: #{tpu_custom_call.1} parent=1 // pred_check
      _
    $region3: #{tpu_custom_call.1} parent=1 // pred_check_branch
      %10 = sbr.rel (0) target = $region5
    $region4: #{tpu_custom_call.1} parent=1 // pred_region
      _
    $region5: #{tpu_custom_call.1} parent=1 // pred_fallthru
      _
    // Predicated region
    $region6: #{tpu_custom_call.1} parent=1 // pred_check
      _
    $region7: #{tpu_custom_call.1} parent=1 // pred_check_branch
      %12 = sbr.rel (0) target = $region9
    $region8: #{tpu_custom_call.1} parent=1 // pred_region
      %s14 = ssub.s32 4096, 4096
      %15 = vsyncadd [#allocation3], %s14
      %s16 = sshll.u32 [#allocation2], 4
      %s17 = int_to_ptr.vmem [resolvable:$true] %s16
      %22 = dma.hbm_to_vmem [thread:$0]  %s1, 4096, %s17, [#allocation3], 512, 512, 32
    $region9: #{tpu_custom_call.1} parent=1 // pred_fallthru
      _
    // Predicated region
    $region10: #{tpu_custom_call.1} parent=1 // pred_check
      _
    $region11: #{tpu_custom_call.1} parent=1 // pred_check_branch
      %24 = sbr.rel (0) target = $region13
    $region12: #{tpu_custom_call.1} parent=1 // pred_region
      %25 = dma.done [#allocation3], 4096
    $region13: #{tpu_custom_call.1} parent=1 // pred_fallthru
      _
    %v26 = vld [vmem:[#allocation2] sm:$0xff]
    %v27 = vld [vmem:[#allocation2 + $0x8] sm:$0xff]
    %v28 = vld [vmem:[#allocation2 + $0x10] sm:$0xff]
    %v29 = vld [vmem:[#allocation2 + $0x18] sm:$0xff]
    %v30 = vld [vmem:[#allocation2 + $0x20] sm:$0xff]
    %v31 = vld [vmem:[#allocation2 + $0x28] sm:$0xff]
    %v32 = vld [vmem:[#allocation2 + $0x30] sm:$0xff]
    %v33 = vld [vmem:[#allocation2 + $0x38] sm:$0xff]
    %v34 = vld [vmem:[#allocation2 + $0x40] sm:$0xff]
    %v35 = vld [vmem:[#allocation2 + $0x48] sm:$0xff]
    %v36 = vld [vmem:[#allocation2 + $0x50] sm:$0xff]
    %v37 = vld [vmem:[#allocation2 + $0x58] sm:$0xff]
    %v38 = vld [vmem:[#allocation2 + $0x60] sm:$0xff]
    %v39 = vld [vmem:[#allocation2 + $0x68] sm:$0xff]
    %v40 = vld [vmem:[#allocation2 + $0x70] sm:$0xff]
    %v41 = vld [vmem:[#allocation2 + $0x78] sm:$0xff]
    %v42 = vld [vmem:[#allocation2 + $0x80] sm:$0xff]
    %v43 = vld [vmem:[#allocation2 + $0x88] sm:$0xff]
    %v44 = vld [vmem:[#allocation2 + $0x90] sm:$0xff]
    %v45 = vld [vmem:[#allocation2 + $0x98] sm:$0xff]
    %v46 = vld [vmem:[#allocation2 + $0xa0] sm:$0xff]
    %v47 = vld [vmem:[#allocation2 + $0xa8] sm:$0xff]
    %v48 = vld [vmem:[#allocation2 + $0xb0] sm:$0xff]
    %v49 = vld [vmem:[#allocation2 + $0xb8] sm:$0xff]
    %v50 = vld [vmem:[#allocation2 + $0xc0] sm:$0xff]
    %v51 = vld [vmem:[#allocation2 + $0xc8] sm:$0xff]
    %v52 = vld [vmem:[#allocation2 + $0xd0] sm:$0xff]
    %v53 = vld [vmem:[#allocation2 + $0xd8] sm:$0xff]
    %v54 = vld [vmem:[#allocation2 + $0xe0] sm:$0xff]
    %v55 = vld [vmem:[#allocation2 + $0xe8] sm:$0xff]
    %v56 = vld [vmem:[#allocation2 + $0xf0] sm:$0xff]
    %v57 = vld [vmem:[#allocation2 + $0xf8] sm:$0xff]
    %v58 = vld [vmem:[%s0] sm:$0xff]
    %v59 = vld [vmem:[%s0 + $0x8] sm:$0xff]
    %v60 = vld [vmem:[%s0 + $0x10] sm:$0xff]
    %v61 = vld [vmem:[%s0 + $0x18] sm:$0xff]
    %v62 = vld [vmem:[%s0 + $0x20] sm:$0xff]
    %v63 = vld [vmem:[%s0 + $0x28] sm:$0xff]
    %v64 = vld [vmem:[%s0 + $0x30] sm:$0xff]
    %v65 = vld [vmem:[%s0 + $0x38] sm:$0xff]
    %67 = vset.pattern.permute.xlu0 0
    %68 = vperm.xlu0 %67, %v58
    %v69 = vpop.permute.xlu0 %68
    %72 = vset.pattern.permute.xlu0 0
    %73 = vperm.xlu0 %72, %v59
    %v74 = vpop.permute.xlu0 %73
    %77 = vset.pattern.permute.xlu0 0
    %78 = vperm.xlu0 %77, %v60
    %v79 = vpop.permute.xlu0 %78
    %82 = vset.pattern.permute.xlu0 0
    %83 = vperm.xlu0 %82, %v61
    %v84 = vpop.permute.xlu0 %83
    %87 = vset.pattern.permute.xlu0 0
    %88 = vperm.xlu0 %87, %v62
    %v89 = vpop.permute.xlu0 %88
    %92 = vset.pattern.permute.xlu0 0
    %93 = vperm.xlu0 %92, %v63
    %v94 = vpop.permute.xlu0 %93
    %97 = vset.pattern.permute.xlu0 0
    %98 = vperm.xlu0 %97, %v64
    %v99 = vpop.permute.xlu0 %98
    %102 = vset.pattern.permute.xlu0 0
    %103 = vperm.xlu0 %102, %v65
    %v104 = vpop.permute.xlu0 %103
    %v106 = vadd.f32 %v26, %v69
    %v107 = vadd.f32 %v27, %v69
    %v108 = vadd.f32 %v28, %v69
    %v109 = vadd.f32 %v29, %v69
    %v110 = vadd.f32 %v30, %v74
    %v111 = vadd.f32 %v31, %v74
    %v112 = vadd.f32 %v32, %v74
    %v113 = vadd.f32 %v33, %v74
    %v114 = vadd.f32 %v34, %v79
    %v115 = vadd.f32 %v35, %v79
    %v116 = vadd.f32 %v36, %v79
    %v117 = vadd.f32 %v37, %v79
    %v118 = vadd.f32 %v38, %v84
    %v119 = vadd.f32 %v39, %v84
    %v120 = vadd.f32 %v40, %v84
    %v121 = vadd.f32 %v41, %v84
    %v122 = vadd.f32 %v42, %v89
    %v123 = vadd.f32 %v43, %v89
    %v124 = vadd.f32 %v44, %v89
    %v125 = vadd.f32 %v45, %v89
    %v126 = vadd.f32 %v46, %v94
    %v127 = vadd.f32 %v47, %v94
    %v128 = vadd.f32 %v48, %v94
    %v129 = vadd.f32 %v49, %v94
    %v130 = vadd.f32 %v50, %v99
    %v131 = vadd.f32 %v51, %v99
    %v132 = vadd.f32 %v52, %v99
    %v133 = vadd.f32 %v53, %v99
    %v134 = vadd.f32 %v54, %v104
    %v135 = vadd.f32 %v55, %v104
    %v136 = vadd.f32 %v56, %v104
    %v137 = vadd.f32 %v57, %v104
    %138 = vst [vmem:[#allocation5] sm:$0xff] %v106
    %139 = vst [vmem:[#allocation5 + $0x8] sm:$0xff] %v107
    %140 = vst [vmem:[#allocation5 + $0x10] sm:$0xff] %v108
    %141 = vst [vmem:[#allocation5 + $0x18] sm:$0xff] %v109
    %142 = vst [vmem:[#allocation5 + $0x20] sm:$0xff] %v110
    %143 = vst [vmem:[#allocation5 + $0x28] sm:$0xff] %v111
    %144 = vst [vmem:[#allocation5 + $0x30] sm:$0xff] %v112
    %145 = vst [vmem:[#allocation5 + $0x38] sm:$0xff] %v113
    %146 = vst [vmem:[#allocation5 + $0x40] sm:$0xff] %v114
    %147 = vst [vmem:[#allocation5 + $0x48] sm:$0xff] %v115
    %148 = vst [vmem:[#allocation5 + $0x50] sm:$0xff] %v116
    %149 = vst [vmem:[#allocation5 + $0x58] sm:$0xff] %v117
    %150 = vst [vmem:[#allocation5 + $0x60] sm:$0xff] %v118
    %151 = vst [vmem:[#allocation5 + $0x68] sm:$0xff] %v119
    %152 = vst [vmem:[#allocation5 + $0x70] sm:$0xff] %v120
    %153 = vst [vmem:[#allocation5 + $0x78] sm:$0xff] %v121
    %154 = vst [vmem:[#allocation5 + $0x80] sm:$0xff] %v122
    %155 = vst [vmem:[#allocation5 + $0x88] sm:$0xff] %v123
    %156 = vst [vmem:[#allocation5 + $0x90] sm:$0xff] %v124
    %157 = vst [vmem:[#allocation5 + $0x98] sm:$0xff] %v125
    %158 = vst [vmem:[#allocation5 + $0xa0] sm:$0xff] %v126
    %159 = vst [vmem:[#allocation5 + $0xa8] sm:$0xff] %v127
    %160 = vst [vmem:[#allocation5 + $0xb0] sm:$0xff] %v128
    %161 = vst [vmem:[#allocation5 + $0xb8] sm:$0xff] %v129
    %162 = vst [vmem:[#allocation5 + $0xc0] sm:$0xff] %v130
    %163 = vst [vmem:[#allocation5 + $0xc8] sm:$0xff] %v131
    %164 = vst [vmem:[#allocation5 + $0xd0] sm:$0xff] %v132
    %165 = vst [vmem:[#allocation5 + $0xd8] sm:$0xff] %v133
    %166 = vst [vmem:[#allocation5 + $0xe0] sm:$0xff] %v134
    %167 = vst [vmem:[#allocation5 + $0xe8] sm:$0xff] %v135
    %168 = vst [vmem:[#allocation5 + $0xf0] sm:$0xff] %v136
    %169 = vst [vmem:[#allocation5 + $0xf8] sm:$0xff] %v137
    // Predicated region
    $region14: #{tpu_custom_call.1} parent=1 // pred_check
      _
    $region15: #{tpu_custom_call.1} parent=1 // pred_check_branch
      %171 = sbr.rel (0) target = $region17
    $region16: #{tpu_custom_call.1} parent=1 // pred_region
      %s173 = ssub.s32 4096, 4096
      %174 = vsyncadd [#allocation4], %s173
      %s175 = sshll.u32 [#allocation5], 4
      %s176 = int_to_ptr.vmem [resolvable:$true] %s175
      %181 = dma.vmem_to_hbm [thread:$0]  %s176, 4096, %s2, [#allocation4], 512, 512, 32
    $region17: #{tpu_custom_call.1} parent=1 // pred_fallthru
      _
    // Predicated region
    $region18: #{tpu_custom_call.1} parent=1 // pred_check
      _
    $region19: #{tpu_custom_call.1} parent=1 // pred_check_branch
      %183 = sbr.rel (0) target = $region21
    $region20: #{tpu_custom_call.1} parent=1 // pred_region
      %184 = dma.done [#allocation4], 4096
    $region21: #{tpu_custom_call.1} parent=1 // pred_fallthru
      _
    %185 = vsyncpa [#allocation3], 1
    %186 = vsyncpa [#allocation4], 1

</llo_original>
